<compile_context>
chip_gen: v7x
topology: tpu7x:2x2x1
jax: 0.10.0
libtpu: 0.0.40
codegen_flags: <defaults>
</compile_context>

<pallas_src>
import functools

import jax
import jax.numpy as jnp
from jax.experimental import pallas as pl
from jax.experimental.pallas import tpu as pltpu

BN_EPS = 1e-5
LEAKY_SLOPE = 0.01  # nn.LeakyReLU() default negative_slope


def _pick_tile_m(hw):
    """Largest lane-dense tile (multiple of 128) that divides H*W, else full."""
    for t in (2048, 1024, 512, 256, 128):
        if hw % t == 0:
            return t
    return hw  # full-dim block (allowed by the (8,128)-or-full rule)


def _stats_fold_kernel(x_ref, w_ref, gamma_ref, beta_ref,
                       weff_ref, shift_ref, s_acc, g_acc, *, m_total):
    # x_ref: (Cin, TM)  w_ref: (Cout, Cin)  gamma/beta: (Cout, 1)
    n = pl.program_id(0)
    m = pl.program_id(1)

    @pl.when(jnp.logical_and(n == 0, m == 0))
    def _():
        s_acc[...] = jnp.zeros_like(s_acc)
        g_acc[...] = jnp.zeros_like(g_acc)

    x = x_ref[...].astype(jnp.float32)                          # (Cin, TM)
    s_acc[...] += jnp.sum(x, axis=1, keepdims=True)             # (Cin, 1)
    # Gram = X X^T, contracting the lane (TM) axis; no explicit transpose needed.
    g_acc[...] += jax.lax.dot_general(
        x, x, (((1,), (1,)), ((), ())), preferred_element_type=jnp.float32)

    @pl.when(jnp.logical_and(n == pl.num_programs(0) - 1,
                             m == pl.num_programs(1) - 1))
    def _():
        inv_m = jnp.float32(1.0 / m_total)
        mean_x = s_acc[...] * inv_m                             # (Cin, 1)
        exx = g_acc[...] * inv_m                                # (Cin, Cin) = E[x x^T]
        w = w_ref[...].astype(jnp.float32)                      # (Cout, Cin)
        mu_y = jnp.dot(w, mean_x, preferred_element_type=jnp.float32)      # (Cout, 1)
        ey2 = jnp.sum(jnp.dot(w, exx, preferred_element_type=jnp.float32) * w,
                      axis=1, keepdims=True)                    # diag(W E[xx^T] W^T)
        var = jnp.maximum(ey2 - mu_y * mu_y, 0.0)               # biased batch variance
        scale = gamma_ref[...] * jax.lax.rsqrt(var + BN_EPS)    # (Cout, 1)
        weff_ref[...] = scale * w                               # diag(scale) @ W
        shift_ref[...] = beta_ref[...] - scale * mu_y           # beta - scale*mean_y


def _norm_lrelu_kernel(x_ref, weff_ref, shift_ref, o_ref):
    # x_ref: (Cin, TM)  weff: (Cout, Cin)  shift: (Cout, 1)  o_ref: (Cout, TM)
    x = x_ref[...].astype(jnp.float32)
    # Tiny-K matmul; kernel is memory-bound so MXU vs VPU choice is immaterial here.
    y = jnp.dot(weff_ref[...], x, preferred_element_type=jnp.float32) + shift_ref[...]
    o_ref[...] = jnp.where(y >= 0, y, LEAKY_SLOPE * y).astype(o_ref.dtype)


def skip_connection_forward(x_nchw, conv_w, conv_b, bn_gamma, bn_beta):
    """x_nchw: (N, Cin, H, W) f32; conv_w: (Cout, Cin, 1, 1); conv_b/bn_*: (Cout,)"""
    del conv_b  # exactly cancelled by train-mode BatchNorm centering
    N, Cin, H, W = x_nchw.shape
    Cout = conv_w.shape[0]
    HW = H * W
    M = N * HW

    x3 = x_nchw.reshape(N, Cin, HW)                   # free view of NCHW (no transpose)
    w = conv_w.reshape(Cout, Cin).astype(jnp.float32)
    gamma = bn_gamma.reshape(Cout, 1).astype(jnp.float32)
    beta = bn_beta.reshape(Cout, 1).astype(jnp.float32)

    tile_m = _pick_tile_m(HW)
    grid = (N, HW // tile_m)

    x_spec = pl.BlockSpec((None, Cin, tile_m), lambda n, m: (n, 0, m))

    def small(shape):
        return pl.BlockSpec(shape, lambda n, m: (0, 0))

    # ---- pass 1: batch statistics -> folded (W_eff, shift) ----
    weff, shift = pl.pallas_call(
        functools.partial(_stats_fold_kernel, m_total=float(M)),
        out_shape=(jax.ShapeDtypeStruct((Cout, Cin), jnp.float32),
                   jax.ShapeDtypeStruct((Cout, 1), jnp.float32)),
        grid_spec=pltpu.PrefetchScalarGridSpec(
            num_scalar_prefetch=0,
            grid=grid,
            in_specs=[x_spec, small((Cout, Cin)), small((Cout, 1)), small((Cout, 1))],
            out_specs=(small((Cout, Cin)), small((Cout, 1))),
            scratch_shapes=[pltpu.VMEM((Cin, 1), jnp.float32),
                            pltpu.VMEM((Cin, Cin), jnp.float32)]),
        compiler_params=pltpu.CompilerParams(
            dimension_semantics=("arbitrary", "arbitrary")),
    )(x3, w, gamma, beta)

    # ---- pass 2: y = W_eff @ x + shift, LeakyReLU, written directly as NCHW ----
    out3 = pl.pallas_call(
        _norm_lrelu_kernel,
        out_shape=jax.ShapeDtypeStruct((N, Cout, HW), jnp.float32),
        grid_spec=pltpu.PrefetchScalarGridSpec(
            num_scalar_prefetch=0,
            grid=grid,
            in_specs=[x_spec, small((Cout, Cin)), small((Cout, 1))],
            out_specs=pl.BlockSpec((None, Cout, tile_m), lambda n, m: (n, 0, m))),
        compiler_params=pltpu.CompilerParams(
            dimension_semantics=("parallel", "parallel")),
    )(x3, weff, shift)

    return out3.reshape(N, Cout, H, W)


def _reference(x, conv_w, conv_b, gamma, beta):
    """Pure-JAX reference of the PyTorch module in train mode."""
    Cout, Cin = conv_w.shape[0], conv_w.shape[1]
    w = conv_w.reshape(Cout, Cin)
    y = jnp.einsum("nchw,oc->nohw", x, w) + conv_b.reshape(1, Cout, 1, 1)
    mean = jnp.mean(y, axis=(0, 2, 3), keepdims=True)
    var = jnp.mean((y - mean) ** 2, axis=(0, 2, 3), keepdims=True)
    yb = (y - mean) * jax.lax.rsqrt(var + BN_EPS) * gamma.reshape(1, Cout, 1, 1) \
         + beta.reshape(1, Cout, 1, 1)
    return jnp.where(yb >= 0, yb, LEAKY_SLOPE * yb)


if __name__ == "__main__":
    key = jax.random.PRNGKey(0)
    k_x, k_w, k_b = jax.random.split(key, 3)

    N, Cin, H, W = 2, 4, 16, 16
    ns = 4  # Cout

    x = jax.random.normal(k_x, (N, Cin, H, W), dtype=jnp.float32)

    # Parameter shapes match nn.Conv2d(Cin, ns, 1) / nn.BatchNorm2d(ns)
    fan_in = Cin * 1 * 1
    bound = 1.0 / (fan_in ** 0.5)
    conv_w = jax.random.uniform(k_w, (ns, Cin, 1, 1), jnp.float32, -bound, bound)
    conv_b = jax.random.uniform(k_b, (ns,), jnp.float32, -bound, bound)
    bn_gamma = jnp.ones((ns,), jnp.float32)   # BatchNorm2d default weight
    bn_beta = jnp.zeros((ns,), jnp.float32)   # BatchNorm2d default bias

    out = skip_connection_forward(x, conv_w, conv_b, bn_gamma, bn_beta)
    jax.block_until_ready(out)

    assert out.shape == (N, ns, H, W)
    ref = _reference(x, conv_w, conv_b, bn_gamma, bn_beta)
    max_err = float(jnp.max(jnp.abs(out - ref)))
    assert max_err < 2e-4, f"mismatch vs reference: {max_err}"
    print("KERNEL_OK")
</pallas_src>

<mosaic_0001>
module attributes {stable_mosaic.version = 11 : i64} {
  func.func @_stats_fold_kernel(%arg0: i32, %arg1: i32, %arg2: memref<1x4x256xf32, #tpu.memory_space<vmem>>, %arg3: memref<4x4xf32, #tpu.memory_space<vmem>>, %arg4: memref<4x1xf32, #tpu.memory_space<vmem>>, %arg5: memref<4x1xf32, #tpu.memory_space<vmem>>, %arg6: memref<4x4xf32, #tpu.memory_space<vmem>>, %arg7: memref<4x1xf32, #tpu.memory_space<vmem>>, %arg8: memref<4x1xf32, #tpu.memory_space<vmem>>, %arg9: memref<4x4xf32, #tpu.memory_space<vmem>>) attributes {dimension_semantics = [#tpu.dimension_semantics<arbitrary>, #tpu.dimension_semantics<arbitrary>], iteration_bounds = array<i64: 2, 1>, scalar_prefetch = 0 : i64, scratch_operands = 2 : i64, tpu.core_type = #tpu.core_type<tc>, window_params = [{transform_indices = @transform_0, window_bounds = array<i64: 1, 4, 256>}, {pipeline_mode = #tpu.pipeline_mode<synchronous>, transform_indices = @transform_1, window_bounds = array<i64: 4, 4>}, {pipeline_mode = #tpu.pipeline_mode<synchronous>, transform_indices = @transform_2, window_bounds = array<i64: 4, 1>}, {pipeline_mode = #tpu.pipeline_mode<synchronous>, transform_indices = @transform_3, window_bounds = array<i64: 4, 1>}, {pipeline_mode = #tpu.pipeline_mode<synchronous>, transform_indices = @transform_4, window_bounds = array<i64: 4, 4>}, {pipeline_mode = #tpu.pipeline_mode<synchronous>, transform_indices = @transform_5, window_bounds = array<i64: 4, 1>}]} {
    %c0_i32 = arith.constant 0 : i32
    %0 = arith.cmpi eq, %arg0, %c0_i32 : i32
    %c0_i32_0 = arith.constant 0 : i32
    %1 = arith.cmpi eq, %arg1, %c0_i32_0 : i32
    %2 = arith.andi %0, %1 : i1
    %3 = arith.extui %2 : i1 to i32
    %c0_i32_1 = arith.constant 0 : i32
    %4 = arith.cmpi ne, %3, %c0_i32_1 : i32
    scf.if %4 {
      %cst_15 = arith.constant 0.000000e+00 : f32
      %21 = vector.broadcast %cst_15 : f32 to vector<4x1xf32>
      %c0_16 = arith.constant 0 : index
      %c0_17 = arith.constant 0 : index
      %22 = vector.load %arg8[%c0_16, %c0_17] : memref<4x1xf32, #tpu.memory_space<vmem>>, vector<4x1xf32>
      tpu.vector_store %arg8[%c0_16, %c0_17], %21 {strides = array<i32>} : memref<4x1xf32, #tpu.memory_space<vmem>>, vector<4x1xf32>,
      %cst_18 = arith.constant 0.000000e+00 : f32
      %23 = vector.broadcast %cst_18 : f32 to vector<4x4xf32>
      %c0_19 = arith.constant 0 : index
      %c0_20 = arith.constant 0 : index
      %24 = vector.load %arg9[%c0_19, %c0_20] : memref<4x4xf32, #tpu.memory_space<vmem>>, vector<4x4xf32>
      tpu.vector_store %arg9[%c0_19, %c0_20], %23 {strides = array<i32>} : memref<4x4xf32, #tpu.memory_space<vmem>>, vector<4x4xf32>,
    } else {
    }
    %c0 = arith.constant 0 : index
    %c0_2 = arith.constant 0 : index
    %c0_3 = arith.constant 0 : index
    %5 = vector.load %arg2[%c0, %c0_2, %c0_3] : memref<1x4x256xf32, #tpu.memory_space<vmem>>, vector<1x4x256xf32>
    %6 = vector.shape_cast %5 : vector<1x4x256xf32> to vector<4x256xf32>
    %c0_4 = arith.constant 0 : index
    %c0_5 = arith.constant 0 : index
    %7 = vector.load %arg8[%c0_4, %c0_5] : memref<4x1xf32, #tpu.memory_space<vmem>>, vector<4x1xf32>
    %cst = arith.constant dense<0.000000e+00> : vector<4xf32>
    %8 = vector.multi_reduction <add>, %6, %cst [1] : vector<4x256xf32> to vector<4xf32>
    %9 = vector.shape_cast %8 : vector<4xf32> to vector<4x1xf32>
    %10 = arith.addf %7, %9 : vector<4x1xf32>
    %c0_6 = arith.constant 0 : index
    %c0_7 = arith.constant 0 : index
    %11 = vector.load %arg8[%c0_6, %c0_7] : memref<4x1xf32, #tpu.memory_space<vmem>>, vector<4x1xf32>
    tpu.vector_store %arg8[%c0_6, %c0_7], %10 {strides = array<i32>} : memref<4x1xf32, #tpu.memory_space<vmem>>, vector<4x1xf32>,
    %c0_8 = arith.constant 0 : index
    %c0_9 = arith.constant 0 : index
    %12 = vector.load %arg9[%c0_8, %c0_9] : memref<4x4xf32, #tpu.memory_space<vmem>>, vector<4x4xf32>
    %cst_10 = arith.constant dense<0.000000e+00> : vector<4x4xf32>
    %13 = tpu.matmul %6, %6, %cst_10 {dimension_numbers = #tpu.dot_dimension_numbers<[1], [1], [0], [0], [0, 0, 1, 0], [], []>} : vector<4x256xf32>, vector<4x256xf32>, vector<4x4xf32> -> vector<4x4xf32>
    %14 = arith.addf %12, %13 : vector<4x4xf32>
    %c0_11 = arith.constant 0 : index
    %c0_12 = arith.constant 0 : index
    %15 = vector.load %arg9[%c0_11, %c0_12] : memref<4x4xf32, #tpu.memory_space<vmem>>, vector<4x4xf32>
    tpu.vector_store %arg9[%c0_11, %c0_12], %14 {strides = array<i32>} : memref<4x4xf32, #tpu.memory_space<vmem>>, vector<4x4xf32>,
    %c1_i32 = arith.constant 1 : i32
    %16 = arith.cmpi eq, %arg0, %c1_i32 : i32
    %c0_i32_13 = arith.constant 0 : i32
    %17 = arith.cmpi eq, %arg1, %c0_i32_13 : i32
    %18 = arith.andi %16, %17 : i1
    %19 = arith.extui %18 : i1 to i32
    %c0_i32_14 = arith.constant 0 : i32
    %20 = arith.cmpi ne, %19, %c0_i32_14 : i32
    scf.if %20 {
      %c0_15 = arith.constant 0 : index
      %c0_16 = arith.constant 0 : index
      %21 = vector.load %arg8[%c0_15, %c0_16] : memref<4x1xf32, #tpu.memory_space<vmem>>, vector<4x1xf32>
      %cst_17 = arith.constant 0.001953125 : f32
      %22 = vector.broadcast %cst_17 : f32 to vector<4x1xf32>
      %23 = arith.mulf %21, %22 : vector<4x1xf32>
      %c0_18 = arith.constant 0 : index
      %c0_19 = arith.constant 0 : index
      %24 = vector.load %arg9[%c0_18, %c0_19] : memref<4x4xf32, #tpu.memory_space<vmem>>, vector<4x4xf32>
      %cst_20 = arith.constant 0.001953125 : f32
      %25 = vector.broadcast %cst_20 : f32 to vector<4x4xf32>
      %26 = arith.mulf %24, %25 : vector<4x4xf32>
      %c0_21 = arith.constant 0 : index
      %c0_22 = arith.constant 0 : index
      %27 = vector.load %arg3[%c0_21, %c0_22] : memref<4x4xf32, #tpu.memory_space<vmem>>, vector<4x4xf32>
      %cst_23 = arith.constant dense<0.000000e+00> : vector<4x1xf32>
      %28 = tpu.matmul %27, %23, %cst_23 {dimension_numbers = #tpu.dot_dimension_numbers<[1], [0], [0], [1], [0, 0, 1, 1], [], []>} : vector<4x4xf32>, vector<4x1xf32>, vector<4x1xf32> -> vector<4x1xf32>
      %cst_24 = arith.constant dense<0.000000e+00> : vector<4x4xf32>
      %29 = tpu.matmul %27, %26, %cst_24 {dimension_numbers = #tpu.dot_dimension_numbers<[1], [0], [0], [1], [0, 0, 1, 1], [], []>} : vector<4x4xf32>, vector<4x4xf32>, vector<4x4xf32> -> vector<4x4xf32>
      %30 = arith.mulf %29, %27 : vector<4x4xf32>
      %cst_25 = arith.constant dense<0.000000e+00> : vector<4xf32>
      %31 = vector.multi_reduction <add>, %30, %cst_25 [1] : vector<4x4xf32> to vector<4xf32>
      %32 = vector.shape_cast %31 : vector<4xf32> to vector<4x1xf32>
      %33 = arith.mulf %28, %28 : vector<4x1xf32>
      %34 = arith.subf %32, %33 : vector<4x1xf32>
      %cst_26 = arith.constant 0.000000e+00 : f32
      %35 = vector.broadcast %cst_26 : f32 to vector<4x1xf32>
      %36 = arith.maximumf %34, %35 : vector<4x1xf32>
      %c0_27 = arith.constant 0 : index
      %c0_28 = arith.constant 0 : index
      %37 = vector.load %arg4[%c0_27, %c0_28] : memref<4x1xf32, #tpu.memory_space<vmem>>, vector<4x1xf32>
      %cst_29 = arith.constant 9.99999974E-6 : f32
      %38 = vector.broadcast %cst_29 : f32 to vector<4x1xf32>
      %39 = arith.addf %36, %38 : vector<4x1xf32>
      %40 = math.rsqrt %39 : vector<4x1xf32>
      %41 = arith.mulf %37, %40 : vector<4x1xf32>
      %42 = vector.broadcast %41 : vector<4x1xf32> to vector<4x4xf32>
      %43 = arith.mulf %42, %27 : vector<4x4xf32>
      %c0_30 = arith.constant 0 : index
      %c0_31 = arith.constant 0 : index
      %44 = vector.load %arg6[%c0_30, %c0_31] : memref<4x4xf32, #tpu.memory_space<vmem>>, vector<4x4xf32>
      tpu.vector_store %arg6[%c0_30, %c0_31], %43 {strides = array<i32>} : memref<4x4xf32, #tpu.memory_space<vmem>>, vector<4x4xf32>,
      %c0_32 = arith.constant 0 : index
      %c0_33 = arith.constant 0 : index
      %45 = vector.load %arg5[%c0_32, %c0_33] : memref<4x1xf32, #tpu.memory_space<vmem>>, vector<4x1xf32>
      %46 = arith.mulf %41, %28 : vector<4x1xf32>
      %47 = arith.subf %45, %46 : vector<4x1xf32>
      %c0_34 = arith.constant 0 : index
      %c0_35 = arith.constant 0 : index
      %48 = vector.load %arg7[%c0_34, %c0_35] : memref<4x1xf32, #tpu.memory_space<vmem>>, vector<4x1xf32>
      tpu.vector_store %arg7[%c0_34, %c0_35], %47 {strides = array<i32>} : memref<4x1xf32, #tpu.memory_space<vmem>>, vector<4x1xf32>,
    } else {
    }
    return
  }
  func.func @transform_0(%arg0: i32, %arg1: i32) -> (i32, i32, i32) {
    %c0_i32 = arith.constant 0 : i32
    %c0_i32_0 = arith.constant 0 : i32
    return %arg0, %c0_i32, %arg1 : i32, i32, i32
  }
  func.func @transform_1(%arg0: i32, %arg1: i32) -> (i32, i32) {
    %c0_i32 = arith.constant 0 : i32
    %c0_i32_0 = arith.constant 0 : i32
    %c0_i32_1 = arith.constant 0 : i32
    return %c0_i32, %c0_i32_0 : i32, i32
  }
  func.func @transform_2(%arg0: i32, %arg1: i32) -> (i32, i32) {
    %c0_i32 = arith.constant 0 : i32
    %c0_i32_0 = arith.constant 0 : i32
    %c0_i32_1 = arith.constant 0 : i32
    return %c0_i32, %c0_i32_0 : i32, i32
  }
  func.func @transform_3(%arg0: i32, %arg1: i32) -> (i32, i32) {
    %c0_i32 = arith.constant 0 : i32
    %c0_i32_0 = arith.constant 0 : i32
    %c0_i32_1 = arith.constant 0 : i32
    return %c0_i32, %c0_i32_0 : i32, i32
  }
  func.func @transform_4(%arg0: i32, %arg1: i32) -> (i32, i32) {
    %c0_i32 = arith.constant 0 : i32
    %c0_i32_0 = arith.constant 0 : i32
    %c0_i32_1 = arith.constant 0 : i32
    return %c0_i32, %c0_i32_0 : i32, i32
  }
  func.func @transform_5(%arg0: i32, %arg1: i32) -> (i32, i32) {
    %c0_i32 = arith.constant 0 : i32
    %c0_i32_0 = arith.constant 0 : i32
    %c0_i32_1 = arith.constant 0 : i32
    return %c0_i32, %c0_i32_0 : i32, i32
  }
}

</mosaic_0001>

<llo_original>
// kernel: tpu_custom_call.1
$region0: #{tpu_custom_call.1}
  #allocation0 [shape = 'u32[]', space=smem, size = 0x4, offset = 0x4, fixed_abs, tag = 'smem constant byte address 0x4 - core index']
  #allocation1 [shape = 'u32[144,128]{1,0:T(1,128)}', space=vmem, size = 0x12000, scoped, tag = 'internal scratch']
  #allocation2 [shape = 'f32[4,1]{1,0:T(4,128)}', space=vmem, size = 0x800, scoped, tag = 'scratch operand']
  #allocation3 [shape = 'f32[4,4]{1,0:T(4,128)}', space=vmem, size = 0x800, scoped, tag = 'scratch operand']
  %s0 = inlined_call_operand.hbm [shape: f32[2,4,256], index: 0, kind: input, shape index: {}]
  %s1 = inlined_call_operand.vmem [shape: f32[4,4], index: 1, kind: input, shape index: {}]
  %s2 = inlined_call_operand.vmem [shape: f32[4,1], index: 2, kind: input, shape index: {}]
  %s3 = inlined_call_operand.vmem [shape: f32[4,1], index: 3, kind: input, shape index: {}]
  %s4 = inlined_call_operand.hbm [shape: f32[4,4], index: 4, kind: output, shape index: {0}]
  %s5 = inlined_call_operand.vmem [shape: f32[4,1], index: 5, kind: output, shape index: {1}]
  %6 = xla_tuple %s4, %s5
  %s7 = sld [smem:[#allocation0]]
  $region69: #{tpu_custom_call.1} parent=0
    _
  %s9 = ssub.s32 1, %s7
  %s10 = scalar_select 0, %s9, %s7
  $region1: #{tpu_custom_call.1} parent=0
    #allocation4 [shape = 'u8[8192]{0}', space=vmem, size = 0x2000, scoped, tag = 'input window, operand 0']
    #allocation5 [shape = 's32[2]{0}', space=sflag, size = 0x8, scoped, tag = 'scoped memory for tpu_custom_call.1']
    #allocation6 [shape = 's32[2]{0}', space=sflag, size = 0x8, scoped, tag = 'scoped memory for tpu_custom_call.1']
    #allocation7 [shape = 'u8[2048]{0}', space=vmem, size = 0x800, scoped, tag = 'output window, operand 0, single buffered']
    %11 = vsyncpa [#allocation5], 0
    %s12 = scalar_lea.sflag [#allocation5], 1
    %13 = vsyncpa %s12, 0
    %14 = vsyncpa [#allocation6], 0
    loop: start=0, step=1, limit=4
    $region2: #{tpu_custom_call.1} parent=1 // loop_pre_header
      _
    $region3: #{tpu_custom_call.1} parent=1 // loop_header
      %s16 = sphi 0, %s20
      %p17 = scmp.ge.s32.totalorder %s16, 4
      %s23 = sphi 0, %s35
      %s24 = sphi 0, %s31
      %s25 = sphi 0, %s23
      %s26 = sphi 0, %s24
      %s27 = sphi 0, %s25
      %s28 = sphi 0, %s26
      %s40 = sphi 0, %s42
      %s43 = sphi 0, %s40
      %s44 = sphi 0, %s43
      %s60 = sphi 0, %s44
      %s64 = sphi 0, %s64
      %s66 = sphi 0, %s64
      %s67 = sphi 0, %s66
      %s81 = sphi 0, %s67
      %s85 = sphi 0, %s85
      %s87 = sphi 0, %s85
      %s88 = sphi 0, %s87
      %s102 = sphi 0, %s88
      %s106 = sphi 0, %s106
      %s108 = sphi 0, %s106
      %s109 = sphi 0, %s108
      %s123 = sphi 0, %s109
      %s127 = sphi 0, %s127
      %s129 = sphi 0, %s127
      %s130 = sphi 0, %s129
      %s144 = sphi 0, %s130
      %s148 = sphi 0, %s148
      %s150 = sphi 0, %s148
      %s151 = sphi 0, %s150
      %s165 = sphi 0, %s151
    $region4: #{tpu_custom_call.1} parent=1 // loop_header_branch
      %19 = sbr.rel (%p17) target = $region8
    $region5: #{tpu_custom_call.1} parent=1 // loop_body
      %s21 = ssub.s32 %s16, 1
      %s22 = ssub.s32 %s16, 2
      %s29 = sadd.s32 1, %s24
      %p30 = scmp.ge.s32.totalorder %s29, 1
      %s31 = scalar_select %p30, 0, %s29
      %s32 = sadd.s32 1, %s23
      %s33 = scalar_select %p30, %s32, %s23
      %p34 = scmp.ge.s32.totalorder %s33, 2
      %s35 = scalar_select %p34, 0, %s33
      %s36 = ssub.s32 %s23, %s35
      %s37 = ssub.s32 %s24, %s31
      %s38 = sor.u32 %s36, %s37
      %p39 = scmp.eq.s32.totalorder %s38, 0
      %s41 = sadd.s32 %s40, 1
      %s42 = scalar_select %p39, %s40, %s41
      %p45 = pneg %p39
      %p46 = scmp.eq.s32.totalorder %s16, 1
      %p47 = por %p45, %p46
      %p48 = scmp.ne.s32.totalorder %s40, %s43
      %p49 = scmp.eq.s32.totalorder %s16, 0
      %p50 = por %p48, %p49
      %p51 = scmp.ne.s32.totalorder %s40, %s43
      %p52 = scmp.eq.s32.totalorder %s21, 1
      %p53 = por %p51, %p52
      %p54 = scmp.ne.s32.totalorder %s43, %s44
      %p55 = scmp.eq.s32.totalorder %s21, 0
      %p56 = por %p54, %p55
      %p57 = scmp.ne.s32.totalorder %s43, %s44
      %p58 = scmp.eq.s32.totalorder %s22, 1
      %p59 = por %p57, %p58
      %p61 = scmp.ne.s32.totalorder %s44, %s60
      %p62 = scmp.eq.s32.totalorder %s22, 0
      %p63 = por %p61, %p62
      %s65 = sadd.s32 %s64, 1
      %p68 = scmp.eq.s32.totalorder %s16, 1
      %p69 = scmp.ne.s32.totalorder %s64, %s66
      %p70 = scmp.eq.s32.totalorder %s16, 0
      %p71 = por %p69, %p70
      %p72 = scmp.ne.s32.totalorder %s64, %s66
      %p73 = scmp.eq.s32.totalorder %s21, 1
      %p74 = por %p72, %p73
      %p75 = scmp.ne.s32.totalorder %s66, %s67
      %p76 = scmp.eq.s32.totalorder %s21, 0
      %p77 = por %p75, %p76
      %p78 = scmp.ne.s32.totalorder %s66, %s67
      %p79 = scmp.eq.s32.totalorder %s22, 1
      %p80 = por %p78, %p79
      %p82 = scmp.ne.s32.totalorder %s67, %s81
      %p83 = scmp.eq.s32.totalorder %s22, 0
      %p84 = por %p82, %p83
      %s86 = sadd.s32 %s85, 1
      %p89 = scmp.eq.s32.totalorder %s16, 1
      %p90 = scmp.ne.s32.totalorder %s85, %s87
      %p91 = scmp.eq.s32.totalorder %s16, 0
      %p92 = por %p90, %p91
      %p93 = scmp.ne.s32.totalorder %s85, %s87
      %p94 = scmp.eq.s32.totalorder %s21, 1
      %p95 = por %p93, %p94
      %p96 = scmp.ne.s32.totalorder %s87, %s88
      %p97 = scmp.eq.s32.totalorder %s21, 0
      %p98 = por %p96, %p97
      %p99 = scmp.ne.s32.totalorder %s87, %s88
      %p100 = scmp.eq.s32.totalorder %s22, 1
      %p101 = por %p99, %p100
      %p103 = scmp.ne.s32.totalorder %s88, %s102
      %p104 = scmp.eq.s32.totalorder %s22, 0
      %p105 = por %p103, %p104
      %s107 = sadd.s32 %s106, 1
      %p110 = scmp.eq.s32.totalorder %s16, 1
      %p111 = scmp.ne.s32.totalorder %s106, %s108
      %p112 = scmp.eq.s32.totalorder %s16, 0
      %p113 = por %p111, %p112
      %p114 = scmp.ne.s32.totalorder %s106, %s108
      %p115 = scmp.eq.s32.totalorder %s21, 1
      %p116 = por %p114, %p115
      %p117 = scmp.ne.s32.totalorder %s108, %s109
      %p118 = scmp.eq.s32.totalorder %s21, 0
      %p119 = por %p117, %p118
      %p120 = scmp.ne.s32.totalorder %s108, %s109
      %p121 = scmp.eq.s32.totalorder %s22, 1
      %p122 = por %p120, %p121
      %p124 = scmp.ne.s32.totalorder %s109, %s123
      %p125 = scmp.eq.s32.totalorder %s22, 0
      %p126 = por %p124, %p125
      %s128 = sadd.s32 %s127, 1
      %p131 = scmp.eq.s32.totalorder %s16, 1
      %p132 = scmp.ne.s32.totalorder %s127, %s129
      %p133 = scmp.eq.s32.totalorder %s16, 0
      %p134 = por %p132, %p133
      %p135 = scmp.ne.s32.totalorder %s127, %s129
      %p136 = scmp.eq.s32.totalorder %s21, 1
      %p137 = por %p135, %p136
      %p138 = scmp.ne.s32.totalorder %s129, %s130
      %p139 = scmp.eq.s32.totalorder %s21, 0
      %p140 = por %p138, %p139
      %p141 = scmp.ne.s32.totalorder %s129, %s130
      %p142 = scmp.eq.s32.totalorder %s22, 1
      %p143 = por %p141, %p142
      %p145 = scmp.ne.s32.totalorder %s130, %s144
      %p146 = scmp.eq.s32.totalorder %s22, 0
      %p147 = por %p145, %p146
      %s149 = sadd.s32 %s148, 1
      %p152 = scmp.eq.s32.totalorder %s16, 1
      %p153 = scmp.ne.s32.totalorder %s148, %s150
      %p154 = scmp.eq.s32.totalorder %s16, 0
      %p155 = por %p153, %p154
      %p156 = scmp.ne.s32.totalorder %s148, %s150
      %p157 = scmp.eq.s32.totalorder %s21, 1
      %p158 = por %p156, %p157
      %p159 = scmp.ne.s32.totalorder %s150, %s151
      %p160 = scmp.eq.s32.totalorder %s21, 0
      %p161 = por %p159, %p160
      %p162 = scmp.ne.s32.totalorder %s150, %s151
      %p163 = scmp.eq.s32.totalorder %s22, 1
      %p164 = por %p162, %p163
      %p166 = scmp.ne.s32.totalorder %s151, %s165
      %p167 = scmp.eq.s32.totalorder %s22, 0
      %p168 = por %p166, %p167
      %p169 = scmp.le.s32.totalorder 1, %s16
      %p170 = scmp.lt.s32.totalorder %s16, 3
      %p171 = pnand %p169, %p170
      %p172 = pneg %p171
      // Predicated region
      $region9: #{tpu_custom_call.1} parent=5 // pred_check
        _
      $region10: #{tpu_custom_call.1} parent=5 // pred_check_branch
        %174 = sbr.rel (%p171) target = $region12
      $region11: #{tpu_custom_call.1} parent=5 // pred_region
        %s175 = ssub.s32 %s16, 1
        // Predicated region
        $region13: #{tpu_custom_call.1} parent=11 // pred_check
          %p176 = pneg %p77
        $region14: #{tpu_custom_call.1} parent=11 // pred_check_branch
          %178 = sbr.rel (%p176) target = $region16
        $region15: #{tpu_custom_call.1} parent=11 // pred_region
          _
        $region16: #{tpu_custom_call.1} parent=11 // pred_fallthru
          _
        // Predicated region
        $region17: #{tpu_custom_call.1} parent=11 // pred_check
          %p179 = pneg %p98
        $region18: #{tpu_custom_call.1} parent=11 // pred_check_branch
          %181 = sbr.rel (%p179) target = $region20
        $region19: #{tpu_custom_call.1} parent=11 // pred_region
          _
        $region20: #{tpu_custom_call.1} parent=11 // pred_fallthru
          _
        // Predicated region
        $region21: #{tpu_custom_call.1} parent=11 // pred_check
          %p182 = pneg %p119
        $region22: #{tpu_custom_call.1} parent=11 // pred_check_branch
          %184 = sbr.rel (%p182) target = $region24
        $region23: #{tpu_custom_call.1} parent=11 // pred_region
          _
        $region24: #{tpu_custom_call.1} parent=11 // pred_fallthru
          _
      $region12: #{tpu_custom_call.1} parent=5 // pred_fallthru
        _
      %p185 = scmp.lt.s32.totalorder %s16, 2
      // Predicated region
      $region25: #{tpu_custom_call.1} parent=5 // pred_check
        %p186 = pneg %p185
      $region26: #{tpu_custom_call.1} parent=5 // pred_check_branch
        %188 = sbr.rel (%p186) target = $region28
      $region27: #{tpu_custom_call.1} parent=5 // pred_region
        // Predicated region
        $region29: #{tpu_custom_call.1} parent=27 // pred_check
          %p189 = pneg %p50
        $region30: #{tpu_custom_call.1} parent=27 // pred_check_branch
          %191 = sbr.rel (%p189) target = $region32
        $region31: #{tpu_custom_call.1} parent=27 // pred_region
          %s192 = sand.u32 %s40, 1
          %s193 = scalar_lea.sflag [#allocation5], %s192
          %s194 = sand.u32 %s40, 1
          %s195 = smul.addr %s194, 8
          %s196 = scalar_lea.vmem [#allocation4], %s195
          %s197 = smul.u32 2, %s24
          %s199 = ssub.s32 128, 128
          %200 = vsyncadd %s193, %s199
          %s201 = smul.addr %s23, 2
          %s202 = sadd.s32 %s197, %s201
          %s203 = smul.addr %s202, 64
          %s204 = scalar_lea.hbm %s0, %s203
          %s206 = sshll.u32 %s196, 4
          %s207 = int_to_ptr.vmem [resolvable:$true] %s206
          %209 = dma.hbm_to_vmem [thread:$0]  %s204, 128, %s207, %s193
        $region32: #{tpu_custom_call.1} parent=27 // pred_fallthru
          _
      $region28: #{tpu_custom_call.1} parent=5 // pred_fallthru
        _
      %p210 = scmp.le.s32.totalorder 1, %s16
      %p211 = scmp.lt.s32.totalorder %s16, 3
      %p212 = pnand %p210, %p211
      %p213 = pneg %p212
      // Predicated region
      $region33: #{tpu_custom_call.1} parent=5 // pred_check
        _
      $region34: #{tpu_custom_call.1} parent=5 // pred_check_branch
        %215 = sbr.rel (%p212) target = $region36
      $region35: #{tpu_custom_call.1} parent=5 // pred_region
        %s216 = ssub.s32 %s16, 1
        %s217 = sand.u32 %s43, 1
        %s218 = scalar_lea.sflag [#allocation5], %s217
        %s219 = sand.u32 %s43, 1
        %s220 = smul.addr %s219, 8
        %s221 = scalar_lea.vmem [#allocation4], %s220
        // Predicated region
        $region37: #{tpu_custom_call.1} parent=35 // pred_check
          %p222 = pneg %p56
        $region38: #{tpu_custom_call.1} parent=35 // pred_check_branch
          %224 = sbr.rel (%p222) target = $region40
        $region39: #{tpu_custom_call.1} parent=35 // pred_region
          %225 = dma.done %s218, 128
        $region40: #{tpu_custom_call.1} parent=35 // pred_fallthru
          _
        %s226 = sand.u32 %s43, 1
        %s227 = scalar_lea.sflag [#allocation5], %s226
        %s228 = sand.u32 %s43, 1
        %s229 = smul.addr %s228, 8
        %s230 = scalar_lea.vmem [#allocation4], %s229
        %p231 = pneg %p56
        %p232 = pneg %p53
        %p233 = pneg %p77
        %p234 = pneg %p74
        %p235 = pneg %p98
        %p236 = pneg %p95
        %p237 = pneg %p119
        %p238 = pneg %p116
        %p239 = pneg %p140
        %p240 = pneg %p137
        %p241 = pneg %p161
        %p242 = pneg %p158
        %s243 = smul.u32 2, %s26
        %p244 = scmp.eq.s32.totalorder %s25, 0
        %p245 = scmp.eq.s32.totalorder %s26, 0
        %p246 = pnand %p244, %p245
        %p247 = pneg %p246
        // Predicated region
        $region41: #{tpu_custom_call.1} parent=35 // pred_check
          _
        $region42: #{tpu_custom_call.1} parent=35 // pred_check_branch
          %249 = sbr.rel (%p246) target = $region44
        $region43: #{tpu_custom_call.1} parent=35 // pred_region
          %vm250 = vcmask 3072
          %251 = vst.msk [vmem:[#allocation2] sm:$0xf] %vm250, 0.0
          %vm252 = vcmask 27648
          %253 = vst.msk [vmem:[#allocation3] sm:$0xf] %vm252, 0.0
        $region44: #{tpu_custom_call.1} parent=35 // pred_fallthru
          _
        %v254 = vld [vmem:[%s221] sm:$0xff]
        %v255 = vld [vmem:[#allocation2] sm:$0xf]
        %v257 = vcombine.high %v254, %v254
        %vm259 = vcmask 1043456
        %v260 = vsel %vm259, %v254, 0.0
        %v261 = vsel %vm259, %v257, 0.0
        %v262 = vadd.f32 %v260, %v261
        %263 = vadd.xlane.f32.xlu0 %v262
        %v264 = vpop.xlane.xlu0 %263
        %v265 = vadd.f32 %v255, %v264
        %vm266 = vcmask 3072
        %267 = vst.msk [vmem:[#allocation2] sm:$0xf] %vm266, %v265
        %v268 = vld [vmem:[#allocation3] sm:$0xf]
        %269 = vmatprep.subr.mxu0 %v257
        %270 = vmatpush1.xpose.msra.mxu0 %v254
        %271 = vmatprep.subr.mxu0 0.0
        %272 = vmatpush1.xpose.msra.mxu0 0.0
        %273 = vmatprep.subr.mxu0 0.0
        %274 = vmatpush1.xpose.msra.mxu0 0.0
        %275 = vmatprep.subr.mxu0 0.0
        %276 = vmatpush1.xpose.msra.mxu0 0.0
        %277 = vmatprep.subr.mxu0 0.0
        %278 = vmatpush1.xpose.msra.mxu0 0.0
        %279 = vmatprep.subr.mxu0 0.0
        %280 = vmatpush1.xpose.msra.mxu0 0.0
        %281 = vmatprep.subr.mxu0 0.0
        %282 = vmatpush1.xpose.msra.mxu0 0.0
        %283 = vmatprep.subr.mxu0 0.0
        %284 = vmatpush1.xpose.msra.mxu0 0.0
        %285 = vmatprep.subr.mxu0 0.0
        %286 = vmatpush1.xpose.msra.mxu0 0.0
        %287 = vmatprep.subr.mxu0 0.0
        %288 = vmatpush1.xpose.msra.mxu0 0.0
        %289 = vmatprep.subr.mxu0 0.0
        %290 = vmatpush1.xpose.msra.mxu0 0.0
        %291 = vmatprep.subr.mxu0 0.0
        %292 = vmatpush1.xpose.msra.mxu0 0.0
        %293 = vmatprep.subr.mxu0 0.0
        %294 = vmatpush1.xpose.msra.mxu0 0.0
        %295 = vmatprep.subr.mxu0 0.0
        %296 = vmatpush1.xpose.msra.mxu0 0.0
        %297 = vmatprep.subr.mxu0 0.0
        %298 = vmatpush1.xpose.msra.mxu0 0.0
        %299 = vmatprep.subr.mxu0 0.0
        %300 = vmatpush1.xpose.msra.mxu0 0.0
        %301 = vmatprep.subr.mxu0 0.0
        %302 = vmatpush1.xpose.msra.mxu0 0.0
        %303 = vmatprep.subr.mxu0 0.0
        %304 = vmatpush1.xpose.msra.mxu0 0.0
        %305 = vmatprep.subr.mxu0 0.0
        %306 = vmatpush1.xpose.msra.mxu0 0.0
        %307 = vmatprep.subr.mxu0 0.0
        %308 = vmatpush1.xpose.msra.mxu0 0.0
        %309 = vmatprep.subr.mxu0 0.0
        %310 = vmatpush1.xpose.msra.mxu0 0.0
        %311 = vmatprep.subr.mxu0 0.0
        %312 = vmatpush1.xpose.msra.mxu0 0.0
        %313 = vmatprep.subr.mxu0 0.0
        %314 = vmatpush1.xpose.msra.mxu0 0.0
        %315 = vmatprep.subr.mxu0 0.0
        %316 = vmatpush1.xpose.msra.mxu0 0.0
        %317 = vmatprep.subr.mxu0 0.0
        %318 = vmatpush1.xpose.msra.mxu0 0.0
        %319 = vmatprep.subr.mxu0 0.0
        %320 = vmatpush1.xpose.msra.mxu0 0.0
        %321 = vmatprep.subr.mxu0 0.0
        %322 = vmatpush1.xpose.msra.mxu0 0.0
        %323 = vmatprep.subr.mxu0 0.0
        %324 = vmatpush1.xpose.msra.mxu0 0.0
        %325 = vmatprep.subr.mxu0 0.0
        %326 = vmatpush1.xpose.msra.mxu0 0.0
        %327 = vmatprep.subr.mxu0 0.0
        %328 = vmatpush1.xpose.msra.mxu0 0.0
        %329 = vmatprep.subr.mxu0 0.0
        %330 = vmatpush1.xpose.msra.mxu0 0.0
        %331 = vmatprep.subr.mxu0 0.0
        %332 = vmatpush1.xpose.msra.mxu0 0.0
        %333 = vmatprep.mubr.f32.mxu0 %v257
        %334 = vmatmul.mubr.f32.gmra.mrb[0].mxu0 %v254
        %v335 = vpop.f32.mrb[0].mxu0
        %v336 = vadd.f32 0.0, %v335
        %v337 = vpop.f32.mrb[0].mxu0
        %338 = vdwg.mxu0
        %v339 = vadd.f32 %v268, %v336
        %vm340 = vcmask 27648
        %341 = vst.msk [vmem:[#allocation3] sm:$0xf] %vm340, %v339
        %p342 = scmp.eq.s32.totalorder %s25, 1
        %p343 = pnand %p342, %p245
        %p344 = pneg %p343
        // Predicated region
        $region45: #{tpu_custom_call.1} parent=35 // pred_check
          _
        $region46: #{tpu_custom_call.1} parent=35 // pred_check_branch
          %346 = sbr.rel (%p343) target = $region48
        $region47: #{tpu_custom_call.1} parent=35 // pred_region
          %v347 = vld [vmem:[#allocation2] sm:$0xf]
          %v348 = vmul.f32 %v347, 0.001953125
          %v349 = vld [vmem:[#allocation3] sm:$0xf]
          %v350 = vmul.f32 %v349, 0.001953125
          %v351 = vld [vmem:[%s1] sm:$0xf]
          %vm352 = vcmask 31744
          %v354 = vsel %vm352, %v351, 0
          %v357 = vsel %vm259, %v348, 0
          %359 = vmatprep.subr.mxu0 0.0
          %360 = vmatpush1.msra.mxu0 %v357
          %361 = vmatprep.subr.mxu0 0.0
          %362 = vmatpush1.msra.mxu0 0.0
          %363 = vmatprep.subr.mxu0 0.0
          %364 = vmatpush1.msra.mxu0 0.0
          %365 = vmatprep.subr.mxu0 0.0
          %366 = vmatpush1.msra.mxu0 0.0
          %367 = vmatprep.subr.mxu0 0.0
          %368 = vmatpush1.msra.mxu0 0.0
          %369 = vmatprep.subr.mxu0 0.0
          %370 = vmatpush1.msra.mxu0 0.0
          %371 = vmatprep.subr.mxu0 0.0
          %372 = vmatpush1.msra.mxu0 0.0
          %373 = vmatprep.subr.mxu0 0.0
          %374 = vmatpush1.msra.mxu0 0.0
          %375 = vmatprep.subr.mxu0 0.0
          %376 = vmatpush1.msra.mxu0 0.0
          %377 = vmatprep.subr.mxu0 0.0
          %378 = vmatpush1.msra.mxu0 0.0
          %379 = vmatprep.subr.mxu0 0.0
          %380 = vmatpush1.msra.mxu0 0.0
          %381 = vmatprep.subr.mxu0 0.0
          %382 = vmatpush1.msra.mxu0 0.0
          %383 = vmatprep.subr.mxu0 0.0
          %384 = vmatpush1.msra.mxu0 0.0
          %385 = vmatprep.subr.mxu0 0.0
          %386 = vmatpush1.msra.mxu0 0.0
          %387 = vmatprep.subr.mxu0 0.0
          %388 = vmatpush1.msra.mxu0 0.0
          %389 = vmatprep.subr.mxu0 0.0
          %390 = vmatpush1.msra.mxu0 0.0
          %391 = vmatprep.subr.mxu0 0.0
          %392 = vmatpush1.msra.mxu0 0.0
          %393 = vmatprep.subr.mxu0 0.0
          %394 = vmatpush1.msra.mxu0 0.0
          %395 = vmatprep.subr.mxu0 0.0
          %396 = vmatpush1.msra.mxu0 0.0
          %397 = vmatprep.subr.mxu0 0.0
          %398 = vmatpush1.msra.mxu0 0.0
          %399 = vmatprep.subr.mxu0 0.0
          %400 = vmatpush1.msra.mxu0 0.0
          %401 = vmatprep.subr.mxu0 0.0
          %402 = vmatpush1.msra.mxu0 0.0
          %403 = vmatprep.subr.mxu0 0.0
          %404 = vmatpush1.msra.mxu0 0.0
          %405 = vmatprep.subr.mxu0 0.0
          %406 = vmatpush1.msra.mxu0 0.0
          %407 = vmatprep.subr.mxu0 0.0
          %408 = vmatpush1.msra.mxu0 0.0
          %409 = vmatprep.subr.mxu0 0.0
          %410 = vmatpush1.msra.mxu0 0.0
          %411 = vmatprep.subr.mxu0 0.0
          %412 = vmatpush1.msra.mxu0 0.0
          %413 = vmatprep.subr.mxu0 0.0
          %414 = vmatpush1.msra.mxu0 0.0
          %415 = vmatprep.subr.mxu0 0.0
          %416 = vmatpush1.msra.mxu0 0.0
          %417 = vmatprep.subr.mxu0 0.0
          %418 = vmatpush1.msra.mxu0 0.0
          %419 = vmatprep.subr.mxu0 0.0
          %420 = vmatpush1.msra.mxu0 0.0
          %421 = vmatprep.subr.mxu0 0.0
          %422 = vmatpush1.msra.mxu0 0.0
          %423 = vmatprep.mubr.f32.mxu0 0.0
          %424 = vmatmul.mubr.f32.gmra.mrb[0].mxu0 %v354
          %v425 = vpop.f32.mrb[0].mxu0
          %v426 = vadd.f32 0.0, %v425
          %v427 = vpop.f32.mrb[0].mxu0
          %428 = vdwg.mxu0
          %v430 = vsel %vm259, %v350, 0
          %432 = vmatprep.subr.mxu0 0.0
          %433 = vmatpush1.msra.mxu0 %v430
          %434 = vmatprep.subr.mxu0 0.0
          %435 = vmatpush1.msra.mxu0 0.0
          %436 = vmatprep.subr.mxu0 0.0
          %437 = vmatpush1.msra.mxu0 0.0
          %438 = vmatprep.subr.mxu0 0.0
          %439 = vmatpush1.msra.mxu0 0.0
          %440 = vmatprep.subr.mxu0 0.0
          %441 = vmatpush1.msra.mxu0 0.0
          %442 = vmatprep.subr.mxu0 0.0
          %443 = vmatpush1.msra.mxu0 0.0
          %444 = vmatprep.subr.mxu0 0.0
          %445 = vmatpush1.msra.mxu0 0.0
          %446 = vmatprep.subr.mxu0 0.0
          %447 = vmatpush1.msra.mxu0 0.0
          %448 = vmatprep.subr.mxu0 0.0
          %449 = vmatpush1.msra.mxu0 0.0
          %450 = vmatprep.subr.mxu0 0.0
          %451 = vmatpush1.msra.mxu0 0.0
          %452 = vmatprep.subr.mxu0 0.0
          %453 = vmatpush1.msra.mxu0 0.0
          %454 = vmatprep.subr.mxu0 0.0
          %455 = vmatpush1.msra.mxu0 0.0
          %456 = vmatprep.subr.mxu0 0.0
          %457 = vmatpush1.msra.mxu0 0.0
          %458 = vmatprep.subr.mxu0 0.0
          %459 = vmatpush1.msra.mxu0 0.0
          %460 = vmatprep.subr.mxu0 0.0
          %461 = vmatpush1.msra.mxu0 0.0
          %462 = vmatprep.subr.mxu0 0.0
          %463 = vmatpush1.msra.mxu0 0.0
          %464 = vmatprep.subr.mxu0 0.0
          %465 = vmatpush1.msra.mxu0 0.0
          %466 = vmatprep.subr.mxu0 0.0
          %467 = vmatpush1.msra.mxu0 0.0
          %468 = vmatprep.subr.mxu0 0.0
          %469 = vmatpush1.msra.mxu0 0.0
          %470 = vmatprep.subr.mxu0 0.0
          %471 = vmatpush1.msra.mxu0 0.0
          %472 = vmatprep.subr.mxu0 0.0
          %473 = vmatpush1.msra.mxu0 0.0
          %474 = vmatprep.subr.mxu0 0.0
          %475 = vmatpush1.msra.mxu0 0.0
          %476 = vmatprep.subr.mxu0 0.0
          %477 = vmatpush1.msra.mxu0 0.0
          %478 = vmatprep.subr.mxu0 0.0
          %479 = vmatpush1.msra.mxu0 0.0
          %480 = vmatprep.subr.mxu0 0.0
          %481 = vmatpush1.msra.mxu0 0.0
          %482 = vmatprep.subr.mxu0 0.0
          %483 = vmatpush1.msra.mxu0 0.0
          %484 = vmatprep.subr.mxu0 0.0
          %485 = vmatpush1.msra.mxu0 0.0
          %486 = vmatprep.subr.mxu0 0.0
          %487 = vmatpush1.msra.mxu0 0.0
          %488 = vmatprep.subr.mxu0 0.0
          %489 = vmatpush1.msra.mxu0 0.0
          %490 = vmatprep.subr.mxu0 0.0
          %491 = vmatpush1.msra.mxu0 0.0
          %492 = vmatprep.subr.mxu0 0.0
          %493 = vmatpush1.msra.mxu0 0.0
          %494 = vmatprep.subr.mxu0 0.0
          %495 = vmatpush1.msra.mxu0 0.0
          %496 = vmatprep.mubr.f32.mxu0 0.0
          %497 = vmatmul.mubr.f32.gmra.mrb[0].mxu0 %v354
          %v498 = vpop.f32.mrb[0].mxu0
          %v499 = vadd.f32 0.0, %v498
          %v500 = vpop.f32.mrb[0].mxu0
          %501 = vdwg.mxu0
          %v502 = vmul.f32 %v499, %v351
          %v503 = vsel %vm340, %v502, 0.0
          %504 = vadd.xlane.f32.xlu0 %v503
          %v505 = vpop.xlane.xlu0 %504
          %v506 = vmul.f32 %v426, %v426
          %v507 = vsub.f32 %v505, %v506
          %v508 = vmax.f32 %v507, 0.0
          %v509 = vld [vmem:[%s2] sm:$0xf]
          %v510 = vadd.f32 %v508, 1e-05
          %v511 = vrsqrt.pop %v510
          %v512 = vmul.f32 %v509, %v511
          %514 = vset.pattern.permute.xlu0 0
          %515 = vperm.xlu0 %514, %v512
          %v516 = vpop.permute.xlu0 %515
          %v518 = vmul.f32 %v516, %v351
          %519 = vst.msk [vmem:[#allocation7] sm:$0xf] %vm340, %v518
          %v520 = vld [vmem:[%s3] sm:$0xf]
          %v521 = vmul.f32 %v512, %v426
          %v522 = vsub.f32 %v520, %v521
          %523 = vst.msk [vmem:[%s5] sm:$0xf] %vm266, %v522
        $region48: #{tpu_custom_call.1} parent=35 // pred_fallthru
          _
        // Predicated region
        $region49: #{tpu_custom_call.1} parent=35 // pred_check
          %p524 = pneg %p137
        $region50: #{tpu_custom_call.1} parent=35 // pred_check_branch
          %526 = sbr.rel (%p524) target = $region52
        $region51: #{tpu_custom_call.1} parent=35 // pred_region
          %s528 = ssub.s32 64, 64
          %529 = vsyncadd [#allocation6], %s528
          %s531 = sshll.u32 [#allocation7], 4
          %s532 = int_to_ptr.vmem [resolvable:$true] %s531
          %534 = dma.vmem_to_hbm [thread:$0]  %s532, 64, %s4, [#allocation6]
        $region52: #{tpu_custom_call.1} parent=35 // pred_fallthru
          _
        // Predicated region
        $region53: #{tpu_custom_call.1} parent=35 // pred_check
          %p535 = pneg %p158
        $region54: #{tpu_custom_call.1} parent=35 // pred_check_branch
          %537 = sbr.rel (%p535) target = $region56
        $region55: #{tpu_custom_call.1} parent=35 // pred_region
          _
        $region56: #{tpu_custom_call.1} parent=35 // pred_fallthru
          _
        // Predicated region
        $region57: #{tpu_custom_call.1} parent=35 // pred_check
          %p538 = pneg %p137
        $region58: #{tpu_custom_call.1} parent=35 // pred_check_branch
          %540 = sbr.rel (%p538) target = $region60
        $region59: #{tpu_custom_call.1} parent=35 // pred_region
          %541 = dma.done [#allocation6], 64
        $region60: #{tpu_custom_call.1} parent=35 // pred_fallthru
          _
        // Predicated region
        $region61: #{tpu_custom_call.1} parent=35 // pred_check
          %p542 = pneg %p158
        $region62: #{tpu_custom_call.1} parent=35 // pred_check_branch
          %544 = sbr.rel (%p542) target = $region64
        $region63: #{tpu_custom_call.1} parent=35 // pred_region
          _
        $region64: #{tpu_custom_call.1} parent=35 // pred_fallthru
          _
      $region36: #{tpu_custom_call.1} parent=5 // pred_fallthru
        _
      %p545 = scmp.le.s32.totalorder 2, %s16
      // Predicated region
      $region65: #{tpu_custom_call.1} parent=5 // pred_check
        %p546 = pneg %p545
      $region66: #{tpu_custom_call.1} parent=5 // pred_check_branch
        %548 = sbr.rel (%p546) target = $region68
      $region67: #{tpu_custom_call.1} parent=5 // pred_region
        %s549 = ssub.s32 %s16, 2
      $region68: #{tpu_custom_call.1} parent=5 // pred_fallthru
        _
    $region6: #{tpu_custom_call.1} parent=1 // loop_footer
      %s20 = sadd.s32 1, %s16
    $region7: #{tpu_custom_call.1} parent=1 // loop_footer_branch
      %15 = sbr.rel target = $region3
    $region8: #{tpu_custom_call.1} parent=1 // loop_exit
      _
    %550 = vsyncpa [#allocation5], 1
    %s551 = scalar_lea.sflag [#allocation5], 1
    %552 = vsyncpa %s551, 1
    %553 = vsyncpa [#allocation6], 1
    %s554 = scalar_lea.sflag [#allocation6], 1
    %555 = vsyncpa %s554, 1

</llo_original>
